<compile_context>
chip_gen: v6e
topology: v6e:2x2x1
jax: 0.10.0
libtpu: 0.0.40
codegen_flags: <defaults>
</compile_context>

<pallas_src>
import jax
import jax.numpy as jnp
from jax.experimental import pallas as pl
from jax.experimental.pallas import tpu as pltpu


# ----------------------------------------------------------------------------
# Kernels
# ----------------------------------------------------------------------------
def _se_kernel_reduce(x_ref, w1t_ref, w2_ref, o_ref):
    """Small-C path: fc1/fc2 via broadcast-multiply + reductions (VPU/XLU).

    x_ref : (bt, C, HW)  input tile (batch tile, channels, flattened spatial)
    w1t_ref: (C, Ch)     fc1 weight, transposed  (Ch = C // scaling)
    w2_ref : (C, Ch)     fc2 weight (PyTorch layout already (C, Ch))
    """
    x = x_ref[...]                                              # native dtype
    inv_hw = jnp.float32(1.0 / x.shape[-1])

    # Squeeze: global average pool over spatial (lane reduction), f32 accum.
    pooled = jnp.sum(x.astype(jnp.float32), axis=-1, keepdims=True) * inv_hw

    w1t = w1t_ref[...].astype(jnp.float32)                      # (C, Ch)
    w2 = w2_ref[...].astype(jnp.float32)                        # (C, Ch)

    # fc1 + ReLU:  h[b, j] = relu(sum_c w1[j, c] * pooled[b, c])
    h = jnp.sum(w1t[None, :, :] * pooled, axis=1, keepdims=True)    # (bt,1,Ch)
    h = jnp.maximum(h, 0.0)

    # fc2 + sigmoid:  s[b, c] = sigmoid(sum_j w2[c, j] * h[b, j])
    s = jnp.sum(w2[None, :, :] * h, axis=2, keepdims=True)          # (bt,C,1)
    scale = (1.0 / (1.0 + jnp.exp(-s))).astype(x.dtype)             # sigmoid

    # Excite: channel-wise rescale in native dtype (no f32 tile temp).
    o_ref[...] = x * scale


def _se_kernel_mxu(x_ref, w1t_ref, w2t_ref, o_ref):
    """Large-C path: fc1/fc2 as two MXU matmuls on a 2-D pooled (bt, C).

    w1t_ref: (C, Ch)    fc1 weight transposed
    w2t_ref: (Ch, C)    fc2 weight transposed
    """
    x = x_ref[...]                                              # native dtype
    inv_hw = jnp.float32(1.0 / x.shape[-1])

    pooled = jnp.sum(x.astype(jnp.float32), axis=-1) * inv_hw       # (bt, C)
    w1t = w1t_ref[...].astype(jnp.float32)                          # (C, Ch)
    w2t = w2t_ref[...].astype(jnp.float32)                          # (Ch, C)

    h = jnp.maximum(
        jnp.dot(pooled, w1t, preferred_element_type=jnp.float32), 0.0)  # (bt,Ch)
    s = jnp.dot(h, w2t, preferred_element_type=jnp.float32)             # (bt,C)
    scale = (1.0 / (1.0 + jnp.exp(-s)))[:, :, None].astype(x.dtype)      # (bt,C,1)

    o_ref[...] = x * scale


# ----------------------------------------------------------------------------
# Tiling / VMEM sizing
# ----------------------------------------------------------------------------
def _vmem_capacity_bytes():
    try:
        return int(pltpu.get_tpu_info().vmem_capacity_bytes)
    except Exception:
        return 64 << 20  # conservative (v7x per-core) fallback


def _pick_batch_tile(batch, slab_bytes, budget_bytes, min_grid_steps):
    """Largest divisor bt of `batch` whose slab fits the budget while keeping
    grid length >= min(min_grid_steps, batch).  Returns (bt, fits_budget)."""
    target_steps = min(min_grid_steps, batch)
    for bt in range(batch, 0, -1):
        if batch % bt:
            continue
        if bt * slab_bytes > budget_bytes:
            continue
        if batch // bt < target_steps:
            continue
        return bt, True
    # Even a single-batch slab exceeds the budget: caller single-buffers bt=1.
    return 1, False


def _se_block_pallas(x3, w1, w2):
    """x3: (B, C, H*W); w1: (Ch, C); w2: (C, Ch). Returns (B, C, H*W)."""
    b, c, hw = x3.shape
    hidden = w1.shape[0]
    itemsize = x3.dtype.itemsize
    # Budget sub-32-bit inputs at 4 B/elem (v5e VPU upconverts bf16 to f32).
    budget_itemsize = max(itemsize, 4)

    capacity = _vmem_capacity_bytes()
    small_vmem = capacity <= (64 << 20)            # v7x-like (64 MiB/core)
    slab_budget = (6 << 20) if small_vmem else (14 << 20)
    min_steps = 4 if small_vmem else 2             # >= 2 steps per v7x core

    per_batch_slab = c * hw * budget_itemsize
    bt, fits = _pick_batch_tile(b, per_batch_slab, slab_budget, min_steps)
    grid = (b // bt,)

    # Oversized-slab fallback: single-buffer the big in/out tiles.
    n_buf = 2 if fits else 1
    pipeline_mode = None if fits else pl.Buffered(1)

    # Need-based VMEM limit: n_buf x (in + out tile) + 2x each weight +
    # possible f32 pooling temp for sub-32-bit inputs + headroom.
    tile_bytes = bt * c * hw * itemsize
    f32_temp = bt * c * hw * 4 if itemsize < 4 else 0
    weight_bytes = 2 * c * hidden * w1.dtype.itemsize
    need = n_buf * 2 * tile_bytes + 2 * weight_bytes + f32_temp + (2 << 20)
    vmem_bytes = int(min(max(need, 8 << 20), int(0.75 * capacity)))

    use_mxu = (c >= 256) and (hidden >= 8)
    if use_mxu:
        kernel = _se_kernel_mxu
        w_a = jnp.transpose(w1)          # (C, Ch)
        w_b = jnp.transpose(w2)          # (Ch, C)
    else:
        kernel = _se_kernel_reduce
        w_a = jnp.transpose(w1)          # (C, Ch)
        w_b = w2                         # (C, Ch)

    def _xo_spec():
        if pipeline_mode is None:
            return pl.BlockSpec((bt, c, hw), lambda i: (i, 0, 0))
        return pl.BlockSpec((bt, c, hw), lambda i: (i, 0, 0),
                            pipeline_mode=pipeline_mode)

    return pl.pallas_call(
        kernel,
        out_shape=jax.ShapeDtypeStruct((b, c, hw), x3.dtype),
        grid_spec=pltpu.PrefetchScalarGridSpec(
            num_scalar_prefetch=0,
            grid=grid,
            in_specs=[
                _xo_spec(),
                pl.BlockSpec(w_a.shape, lambda i: (0, 0)),
                pl.BlockSpec(w_b.shape, lambda i: (0, 0)),
            ],
            out_specs=_xo_spec(),
        ),
        compiler_params=pltpu.CompilerParams(
            dimension_semantics=("parallel",),
            vmem_limit_bytes=vmem_bytes,
        ),
    )(x3, w_a, w_b)


# ----------------------------------------------------------------------------
# Module wrapper
# ----------------------------------------------------------------------------
class SE_block:
    """JAX/Pallas port of the PyTorch SE_block module (forward pass)."""

    def __init__(self, channel, scaling=16, *, key=None, param_dtype=jnp.float32):
        self.channel = int(channel)
        self.hidden = self.channel // int(scaling)
        assert self.hidden >= 1, "channel // scaling must be >= 1"
        if key is None:
            key = jax.random.PRNGKey(0)
        k1, k2 = jax.random.split(key)
        # PyTorch nn.Linear(bias=False) weight shapes / uniform(-1/sqrt(fan_in)).
        b1 = 1.0 / (self.channel ** 0.5)
        b2 = 1.0 / (self.hidden ** 0.5)
        self.w1 = jax.random.uniform(
            k1, (self.hidden, self.channel), param_dtype, minval=-b1, maxval=b1)
        self.w2 = jax.random.uniform(
            k2, (self.channel, self.hidden), param_dtype, minval=-b2, maxval=b2)

    def __call__(self, x):
        b, c, h, w = x.shape
        assert c == self.channel
        x3 = x.reshape(b, c, h * w)                 # free contiguous reshape
        y3 = _se_block_pallas(x3, self.w1, self.w2)
        return y3.reshape(b, c, h, w)


def _ref_se_block(x, w1, w2):
    """Pure-JAX reference mirroring the PyTorch forward."""
    pooled = jnp.mean(x, axis=(2, 3))                       # (B, C)
    h = jnp.maximum(pooled @ w1.T, 0.0)                     # (B, Ch)
    s = jax.nn.sigmoid(h @ w2.T)                            # (B, C)
    return x * s[:, :, None, None]


if __name__ == "__main__":
    key = jax.random.PRNGKey(0)
    kx, kp = jax.random.split(key)

    # channel=64 with the module's default scaling=16 -> hidden=4
    # (channel=4 would give a degenerate 0-width hidden layer in the original
    #  PyTorch module, so 64 channels is the smallest sensible config).
    B, C, H, W = 2, 64, 16, 16
    x = jax.random.normal(kx, (B, C, H, W), dtype=jnp.float32)

    se = SE_block(C, scaling=16, key=kp)
    y = jax.block_until_ready(se(x))
    assert y.shape == (B, C, H, W)

    y_ref = _ref_se_block(x, se.w1, se.w2)
    err = float(jnp.max(jnp.abs(y - y_ref)))
    assert err < 1e-5, f"max abs error {err}"

    print("KERNEL_OK")
</pallas_src>

<mosaic_0001>
module attributes {stable_mosaic.version = 11 : i64} {
  func.func @_se_kernel_reduce(%arg0: i32, %arg1: memref<1x64x256xf32, #tpu.memory_space<vmem>>, %arg2: memref<64x4xf32, #tpu.memory_space<vmem>>, %arg3: memref<64x4xf32, #tpu.memory_space<vmem>>, %arg4: memref<1x64x256xf32, #tpu.memory_space<vmem>>) attributes {dimension_semantics = [#tpu.dimension_semantics<parallel>], iteration_bounds = array<i64: 2>, scalar_prefetch = 0 : i64, scratch_operands = 0 : i64, tpu.core_type = #tpu.core_type<tc>, window_params = [{transform_indices = @transform_0, window_bounds = array<i64: 1, 64, 256>}, {pipeline_mode = #tpu.pipeline_mode<synchronous>, transform_indices = @transform_1, window_bounds = array<i64: 64, 4>}, {pipeline_mode = #tpu.pipeline_mode<synchronous>, transform_indices = @transform_2, window_bounds = array<i64: 64, 4>}, {transform_indices = @transform_3, window_bounds = array<i64: 1, 64, 256>}]} {
    %c0 = arith.constant 0 : index
    %c0_0 = arith.constant 0 : index
    %c0_1 = arith.constant 0 : index
    %0 = vector.load %arg1[%c0, %c0_0, %c0_1] : memref<1x64x256xf32, #tpu.memory_space<vmem>>, vector<1x64x256xf32>
    %cst = arith.constant dense<0.000000e+00> : vector<1x64xf32>
    %1 = vector.multi_reduction <add>, %0, %cst [2] : vector<1x64x256xf32> to vector<1x64xf32>
    %2 = vector.shape_cast %1 : vector<1x64xf32> to vector<1x64x1xf32>
    %cst_2 = arith.constant 3.906250e-03 : f32
    %3 = vector.broadcast %cst_2 : f32 to vector<1x64x1xf32>
    %4 = arith.mulf %2, %3 : vector<1x64x1xf32>
    %c0_3 = arith.constant 0 : index
    %c0_4 = arith.constant 0 : index
    %5 = vector.load %arg2[%c0_3, %c0_4] : memref<64x4xf32, #tpu.memory_space<vmem>>, vector<64x4xf32>
    %c0_5 = arith.constant 0 : index
    %c0_6 = arith.constant 0 : index
    %6 = vector.load %arg3[%c0_5, %c0_6] : memref<64x4xf32, #tpu.memory_space<vmem>>, vector<64x4xf32>
    %7 = vector.shape_cast %5 : vector<64x4xf32> to vector<1x64x4xf32>
    %8 = vector.broadcast %4 : vector<1x64x1xf32> to vector<1x64x4xf32>
    %9 = arith.mulf %7, %8 : vector<1x64x4xf32>
    %cst_7 = arith.constant dense<0.000000e+00> : vector<1x4xf32>
    %10 = vector.multi_reduction <add>, %9, %cst_7 [1] : vector<1x64x4xf32> to vector<1x4xf32>
    %11 = vector.shape_cast %10 : vector<1x4xf32> to vector<1x1x4xf32>
    %cst_8 = arith.constant 0.000000e+00 : f32
    %12 = vector.broadcast %cst_8 : f32 to vector<1x1x4xf32>
    %13 = arith.maximumf %11, %12 : vector<1x1x4xf32>
    %14 = vector.shape_cast %6 : vector<64x4xf32> to vector<1x64x4xf32>
    %15 = vector.broadcast %13 : vector<1x1x4xf32> to vector<1x64x4xf32>
    %16 = arith.mulf %14, %15 : vector<1x64x4xf32>
    %cst_9 = arith.constant dense<0.000000e+00> : vector<1x64xf32>
    %17 = vector.multi_reduction <add>, %16, %cst_9 [2] : vector<1x64x4xf32> to vector<1x64xf32>
    %18 = vector.shape_cast %17 : vector<1x64xf32> to vector<1x64x1xf32>
    %cst_10 = arith.constant 0.000000e+00 : f32
    %19 = vector.broadcast %cst_10 : f32 to vector<1x64x1xf32>
    %20 = arith.subf %19, %18 : vector<1x64x1xf32>
    %21 = math.exp %20 : vector<1x64x1xf32>
    %cst_11 = arith.constant 1.000000e+00 : f32
    %22 = vector.broadcast %cst_11 : f32 to vector<1x64x1xf32>
    %23 = arith.addf %22, %21 : vector<1x64x1xf32>
    %cst_12 = arith.constant 1.000000e+00 : f32
    %24 = vector.broadcast %cst_12 : f32 to vector<1x64x1xf32>
    %25 = arith.divf %24, %23 : vector<1x64x1xf32>
    %26 = vector.broadcast %25 : vector<1x64x1xf32> to vector<1x64x256xf32>
    %27 = arith.mulf %0, %26 : vector<1x64x256xf32>
    %c0_13 = arith.constant 0 : index
    %c0_14 = arith.constant 0 : index
    %c0_15 = arith.constant 0 : index
    %28 = vector.load %arg4[%c0_13, %c0_14, %c0_15] : memref<1x64x256xf32, #tpu.memory_space<vmem>>, vector<1x64x256xf32>
    tpu.vector_store %arg4[%c0_13, %c0_14, %c0_15], %27 {strides = array<i32>} : memref<1x64x256xf32, #tpu.memory_space<vmem>>, vector<1x64x256xf32>,
    return
  }
  func.func @transform_0(%arg0: i32) -> (i32, i32, i32) {
    %c0_i32 = arith.constant 0 : i32
    %c0_i32_0 = arith.constant 0 : i32
    %c0_i32_1 = arith.constant 0 : i32
    return %arg0, %c0_i32, %c0_i32_0 : i32, i32, i32
  }
  func.func @transform_1(%arg0: i32) -> (i32, i32) {
    %c0_i32 = arith.constant 0 : i32
    %c0_i32_0 = arith.constant 0 : i32
    %c0_i32_1 = arith.constant 0 : i32
    return %c0_i32, %c0_i32_0 : i32, i32
  }
  func.func @transform_2(%arg0: i32) -> (i32, i32) {
    %c0_i32 = arith.constant 0 : i32
    %c0_i32_0 = arith.constant 0 : i32
    %c0_i32_1 = arith.constant 0 : i32
    return %c0_i32, %c0_i32_0 : i32, i32
  }
  func.func @transform_3(%arg0: i32) -> (i32, i32, i32) {
    %c0_i32 = arith.constant 0 : i32
    %c0_i32_0 = arith.constant 0 : i32
    %c0_i32_1 = arith.constant 0 : i32
    return %arg0, %c0_i32, %c0_i32_0 : i32, i32, i32
  }
}

</mosaic_0001>

<llo_original>
// kernel: tpu_custom_call.1
$region0: #{tpu_custom_call.1}
  #allocation0 [shape = 'u32[]', space=smem, size = 0x4, offset = 0x4, fixed_abs, tag = 'smem constant byte address 0x4 - core index']
  #allocation1 [shape = 'u32[144,128]{1,0:T(1,128)}', space=vmem, size = 0x12000, scoped, tag = 'internal scratch']
  %s0 = inlined_call_operand.hbm [shape: f32[2,64,256], index: 0, kind: input, shape index: {}]
  %s1 = inlined_call_operand.vmem [shape: f32[64,4], index: 1, kind: input, shape index: {}]
  %s2 = inlined_call_operand.vmem [shape: f32[64,4], index: 2, kind: input, shape index: {}]
  %s3 = inlined_call_operand.hbm [shape: f32[2,64,256], index: 3, kind: output, shape index: {}]
  %s4 = sld [smem:[#allocation0]]
  $region49: #{tpu_custom_call.1} parent=0
    _
  %s6 = ssub.s32 1, %s4
  %s7 = scalar_select 0, %s6, %s4
  $region1: #{tpu_custom_call.1} parent=0
    #allocation2 [shape = 'u8[131072]{0}', space=vmem, size = 0x20000, scoped, tag = 'input window, operand 0']
    #allocation3 [shape = 's32[2]{0}', space=sflag, size = 0x8, scoped, tag = 'scoped memory for tpu_custom_call.1']
    #allocation4 [shape = 's32[2]{0}', space=sflag, size = 0x8, scoped, tag = 'scoped memory for tpu_custom_call.1']
    #allocation5 [shape = 'u8[131072]{0}', space=vmem, size = 0x20000, scoped, tag = 'output window, operand 0']
    %8 = vsyncpa [#allocation3], 0
    %s9 = scalar_lea.sflag [#allocation3], 1
    %10 = vsyncpa %s9, 0
    %11 = vsyncpa [#allocation4], 0
    %s12 = scalar_lea.sflag [#allocation4], 1
    %13 = vsyncpa %s12, 0
    loop: start=0, step=1, limit=4
    $region2: #{tpu_custom_call.1} parent=1 // loop_pre_header
      _
    $region3: #{tpu_custom_call.1} parent=1 // loop_header
      %s15 = sphi 0, %s19
      %p16 = scmp.ge.s32.totalorder %s15, 4
      %s25 = sphi 0, %s27
      %s28 = sphi 0, %s25
      %s29 = sphi 0, %s28
      %s45 = sphi 0, %s29
      %s49 = sphi 0, %s49
      %s51 = sphi 0, %s49
      %s52 = sphi 0, %s51
      %s66 = sphi 0, %s52
      %s70 = sphi 0, %s70
      %s72 = sphi 0, %s70
      %s73 = sphi 0, %s72
      %s87 = sphi 0, %s73
      %s93 = sphi 0, %s95
      %s96 = sphi 0, %s93
      %s97 = sphi 0, %s96
      %s113 = sphi 0, %s97
    $region4: #{tpu_custom_call.1} parent=1 // loop_header_branch
      %18 = sbr.rel (%p16) target = $region8
    $region5: #{tpu_custom_call.1} parent=1 // loop_body
      %s20 = ssub.s32 %s15, 1
      %s21 = ssub.s32 %s15, 2
      %s22 = sadd.s32 %s15, 1
      %s23 = ssub.s32 %s15, %s22
      %p24 = scmp.eq.s32.totalorder %s23, 0
      %s26 = sadd.s32 %s25, 1
      %s27 = scalar_select %p24, %s25, %s26
      %p30 = pneg %p24
      %p31 = scmp.eq.s32.totalorder %s15, 1
      %p32 = por %p30, %p31
      %p33 = scmp.ne.s32.totalorder %s25, %s28
      %p34 = scmp.eq.s32.totalorder %s15, 0
      %p35 = por %p33, %p34
      %p36 = scmp.ne.s32.totalorder %s25, %s28
      %p37 = scmp.eq.s32.totalorder %s20, 1
      %p38 = por %p36, %p37
      %p39 = scmp.ne.s32.totalorder %s28, %s29
      %p40 = scmp.eq.s32.totalorder %s20, 0
      %p41 = por %p39, %p40
      %p42 = scmp.ne.s32.totalorder %s28, %s29
      %p43 = scmp.eq.s32.totalorder %s21, 1
      %p44 = por %p42, %p43
      %p46 = scmp.ne.s32.totalorder %s29, %s45
      %p47 = scmp.eq.s32.totalorder %s21, 0
      %p48 = por %p46, %p47
      %s50 = sadd.s32 %s49, 1
      %p53 = scmp.eq.s32.totalorder %s15, 1
      %p54 = scmp.ne.s32.totalorder %s49, %s51
      %p55 = scmp.eq.s32.totalorder %s15, 0
      %p56 = por %p54, %p55
      %p57 = scmp.ne.s32.totalorder %s49, %s51
      %p58 = scmp.eq.s32.totalorder %s20, 1
      %p59 = por %p57, %p58
      %p60 = scmp.ne.s32.totalorder %s51, %s52
      %p61 = scmp.eq.s32.totalorder %s20, 0
      %p62 = por %p60, %p61
      %p63 = scmp.ne.s32.totalorder %s51, %s52
      %p64 = scmp.eq.s32.totalorder %s21, 1
      %p65 = por %p63, %p64
      %p67 = scmp.ne.s32.totalorder %s52, %s66
      %p68 = scmp.eq.s32.totalorder %s21, 0
      %p69 = por %p67, %p68
      %s71 = sadd.s32 %s70, 1
      %p74 = scmp.eq.s32.totalorder %s15, 1
      %p75 = scmp.ne.s32.totalorder %s70, %s72
      %p76 = scmp.eq.s32.totalorder %s15, 0
      %p77 = por %p75, %p76
      %p78 = scmp.ne.s32.totalorder %s70, %s72
      %p79 = scmp.eq.s32.totalorder %s20, 1
      %p80 = por %p78, %p79
      %p81 = scmp.ne.s32.totalorder %s72, %s73
      %p82 = scmp.eq.s32.totalorder %s20, 0
      %p83 = por %p81, %p82
      %p84 = scmp.ne.s32.totalorder %s72, %s73
      %p85 = scmp.eq.s32.totalorder %s21, 1
      %p86 = por %p84, %p85
      %p88 = scmp.ne.s32.totalorder %s73, %s87
      %p89 = scmp.eq.s32.totalorder %s21, 0
      %p90 = por %p88, %p89
      %s91 = ssub.s32 %s15, %s22
      %p92 = scmp.eq.s32.totalorder %s91, 0
      %s94 = sadd.s32 %s93, 1
      %s95 = scalar_select %p92, %s93, %s94
      %p98 = pneg %p92
      %p99 = scmp.eq.s32.totalorder %s15, 1
      %p100 = por %p98, %p99
      %p101 = scmp.ne.s32.totalorder %s93, %s96
      %p102 = scmp.eq.s32.totalorder %s15, 0
      %p103 = por %p101, %p102
      %p104 = scmp.ne.s32.totalorder %s93, %s96
      %p105 = scmp.eq.s32.totalorder %s20, 1
      %p106 = por %p104, %p105
      %p107 = scmp.ne.s32.totalorder %s96, %s97
      %p108 = scmp.eq.s32.totalorder %s20, 0
      %p109 = por %p107, %p108
      %p110 = scmp.ne.s32.totalorder %s96, %s97
      %p111 = scmp.eq.s32.totalorder %s21, 1
      %p112 = por %p110, %p111
      %p114 = scmp.ne.s32.totalorder %s97, %s113
      %p115 = scmp.eq.s32.totalorder %s21, 0
      %p116 = por %p114, %p115
      %p117 = scmp.le.s32.totalorder 1, %s15
      %p118 = scmp.lt.s32.totalorder %s15, 3
      %p119 = pnand %p117, %p118
      %p120 = pneg %p119
      // Predicated region
      $region9: #{tpu_custom_call.1} parent=5 // pred_check
        _
      $region10: #{tpu_custom_call.1} parent=5 // pred_check_branch
        %122 = sbr.rel (%p119) target = $region12
      $region11: #{tpu_custom_call.1} parent=5 // pred_region
        %s123 = ssub.s32 %s15, 1
        // Predicated region
        $region13: #{tpu_custom_call.1} parent=11 // pred_check
          %p124 = pneg %p62
        $region14: #{tpu_custom_call.1} parent=11 // pred_check_branch
          %126 = sbr.rel (%p124) target = $region16
        $region15: #{tpu_custom_call.1} parent=11 // pred_region
          _
        $region16: #{tpu_custom_call.1} parent=11 // pred_fallthru
          _
        // Predicated region
        $region17: #{tpu_custom_call.1} parent=11 // pred_check
          %p127 = pneg %p83
        $region18: #{tpu_custom_call.1} parent=11 // pred_check_branch
          %129 = sbr.rel (%p127) target = $region20
        $region19: #{tpu_custom_call.1} parent=11 // pred_region
          _
        $region20: #{tpu_custom_call.1} parent=11 // pred_fallthru
          _
      $region12: #{tpu_custom_call.1} parent=5 // pred_fallthru
        _
      %p130 = scmp.lt.s32.totalorder %s15, 2
      // Predicated region
      $region21: #{tpu_custom_call.1} parent=5 // pred_check
        %p131 = pneg %p130
      $region22: #{tpu_custom_call.1} parent=5 // pred_check_branch
        %133 = sbr.rel (%p131) target = $region24
      $region23: #{tpu_custom_call.1} parent=5 // pred_region
        // Predicated region
        $region25: #{tpu_custom_call.1} parent=23 // pred_check
          %p134 = pneg %p35
        $region26: #{tpu_custom_call.1} parent=23 // pred_check_branch
          %136 = sbr.rel (%p134) target = $region28
        $region27: #{tpu_custom_call.1} parent=23 // pred_region
          %s137 = sand.u32 %s25, 1
          %s138 = scalar_lea.sflag [#allocation3], %s137
          %s139 = sand.u32 %s25, 1
          %s140 = smul.addr %s139, 128
          %s141 = scalar_lea.vmem [#allocation2], %s140
          %s143 = ssub.s32 2048, 2048
          %144 = vsyncadd %s138, %s143
          %s145 = smul.addr %s15, 16
          %s146 = smul.addr %s145, 128
          %s147 = scalar_lea.hbm %s0, %s146
          %s148 = sshll.u32 %s141, 4
          %s149 = int_to_ptr.vmem [resolvable:$true] %s148
          %154 = dma.hbm_to_vmem [thread:$0]  %s147, 2048, %s149, %s138, 256, 256, 16
        $region28: #{tpu_custom_call.1} parent=23 // pred_fallthru
          _
      $region24: #{tpu_custom_call.1} parent=5 // pred_fallthru
        _
      %p155 = scmp.le.s32.totalorder 1, %s15
      %p156 = scmp.lt.s32.totalorder %s15, 3
      %p157 = pnand %p155, %p156
      %p158 = pneg %p157
      // Predicated region
      $region29: #{tpu_custom_call.1} parent=5 // pred_check
        _
      $region30: #{tpu_custom_call.1} parent=5 // pred_check_branch
        %160 = sbr.rel (%p157) target = $region32
      $region31: #{tpu_custom_call.1} parent=5 // pred_region
        %s161 = ssub.s32 %s15, 1
        %s162 = sand.u32 %s28, 1
        %s163 = scalar_lea.sflag [#allocation3], %s162
        %s164 = sand.u32 %s28, 1
        %s165 = smul.addr %s164, 128
        %s166 = scalar_lea.vmem [#allocation2], %s165
        // Predicated region
        $region33: #{tpu_custom_call.1} parent=31 // pred_check
          %p167 = pneg %p41
        $region34: #{tpu_custom_call.1} parent=31 // pred_check_branch
          %169 = sbr.rel (%p167) target = $region36
        $region35: #{tpu_custom_call.1} parent=31 // pred_region
          %170 = dma.done %s163, 2048
        $region36: #{tpu_custom_call.1} parent=31 // pred_fallthru
          _
        %s171 = sand.u32 %s28, 1
        %s172 = scalar_lea.sflag [#allocation3], %s171
        %s173 = sand.u32 %s28, 1
        %s174 = smul.addr %s173, 128
        %s175 = scalar_lea.vmem [#allocation2], %s174
        %p176 = pneg %p41
        %p177 = pneg %p38
        %p178 = pneg %p62
        %p179 = pneg %p59
        %p180 = pneg %p83
        %p181 = pneg %p80
        %p182 = pneg %p109
        %p183 = pneg %p106
        %s184 = sand.u32 %s96, 1
        %s185 = scalar_lea.sflag [#allocation4], %s184
        %s186 = sand.u32 %s96, 1
        %s187 = smul.addr %s186, 128
        %s188 = scalar_lea.vmem [#allocation5], %s187
        %v189 = vld [vmem:[%s166] sm:$0xff]
        %v190 = vld [vmem:[%s166 + $0x8] sm:$0xff]
        %v191 = vld [vmem:[%s166 + $0x10] sm:$0xff]
        %v192 = vld [vmem:[%s166 + $0x18] sm:$0xff]
        %v193 = vld [vmem:[%s166 + $0x20] sm:$0xff]
        %v194 = vld [vmem:[%s166 + $0x28] sm:$0xff]
        %v195 = vld [vmem:[%s166 + $0x30] sm:$0xff]
        %v196 = vld [vmem:[%s166 + $0x38] sm:$0xff]
        %v197 = vld [vmem:[%s166 + $0x40] sm:$0xff]
        %v198 = vld [vmem:[%s166 + $0x48] sm:$0xff]
        %v199 = vld [vmem:[%s166 + $0x50] sm:$0xff]
        %v200 = vld [vmem:[%s166 + $0x58] sm:$0xff]
        %v201 = vld [vmem:[%s166 + $0x60] sm:$0xff]
        %v202 = vld [vmem:[%s166 + $0x68] sm:$0xff]
        %v203 = vld [vmem:[%s166 + $0x70] sm:$0xff]
        %v204 = vld [vmem:[%s166 + $0x78] sm:$0xff]
        %v205 = vadd.f32 %v189, %v190
        %206 = vadd.xlane.f32.xlu0 %v205
        %v207 = vpop.xlane.xlu0 %206
        %v208 = vadd.f32 %v191, %v192
        %209 = vadd.xlane.f32.xlu0 %v208
        %v210 = vpop.xlane.xlu0 %209
        %v211 = vadd.f32 %v193, %v194
        %212 = vadd.xlane.f32.xlu0 %v211
        %v213 = vpop.xlane.xlu0 %212
        %v214 = vadd.f32 %v195, %v196
        %215 = vadd.xlane.f32.xlu0 %v214
        %v216 = vpop.xlane.xlu0 %215
        %v217 = vadd.f32 %v197, %v198
        %218 = vadd.xlane.f32.xlu0 %v217
        %v219 = vpop.xlane.xlu0 %218
        %v220 = vadd.f32 %v199, %v200
        %221 = vadd.xlane.f32.xlu0 %v220
        %v222 = vpop.xlane.xlu0 %221
        %v223 = vadd.f32 %v201, %v202
        %224 = vadd.xlane.f32.xlu0 %v223
        %v225 = vpop.xlane.xlu0 %224
        %v226 = vadd.f32 %v203, %v204
        %227 = vadd.xlane.f32.xlu0 %v226
        %v228 = vpop.xlane.xlu0 %227
        %v229 = vmul.f32 %v207, 0.00390625
        %v230 = vmul.f32 %v210, 0.00390625
        %v231 = vmul.f32 %v213, 0.00390625
        %v232 = vmul.f32 %v216, 0.00390625
        %v233 = vmul.f32 %v219, 0.00390625
        %v234 = vmul.f32 %v222, 0.00390625
        %v235 = vmul.f32 %v225, 0.00390625
        %v236 = vmul.f32 %v228, 0.00390625
        %v237 = vld [vmem:[%s1] sm:$0xff]
        %v238 = vld [vmem:[%s1 + $0x8] sm:$0xff]
        %v239 = vld [vmem:[%s1 + $0x10] sm:$0xff]
        %v240 = vld [vmem:[%s1 + $0x18] sm:$0xff]
        %v241 = vld [vmem:[%s1 + $0x20] sm:$0xff]
        %v242 = vld [vmem:[%s1 + $0x28] sm:$0xff]
        %v243 = vld [vmem:[%s1 + $0x30] sm:$0xff]
        %v244 = vld [vmem:[%s1 + $0x38] sm:$0xff]
        %v245 = vld [vmem:[%s2] sm:$0xff]
        %v246 = vld [vmem:[%s2 + $0x8] sm:$0xff]
        %v247 = vld [vmem:[%s2 + $0x10] sm:$0xff]
        %v248 = vld [vmem:[%s2 + $0x18] sm:$0xff]
        %v249 = vld [vmem:[%s2 + $0x20] sm:$0xff]
        %v250 = vld [vmem:[%s2 + $0x28] sm:$0xff]
        %v251 = vld [vmem:[%s2 + $0x30] sm:$0xff]
        %v252 = vld [vmem:[%s2 + $0x38] sm:$0xff]
        %v253 = vmul.f32 %v237, %v229
        %v254 = vmul.f32 %v238, %v230
        %v255 = vmul.f32 %v239, %v231
        %v256 = vmul.f32 %v240, %v232
        %v257 = vmul.f32 %v241, %v233
        %v258 = vmul.f32 %v242, %v234
        %v259 = vmul.f32 %v243, %v235
        %v260 = vmul.f32 %v244, %v236
        %vm261 = vcmask 31744
        %v262 = vsel %vm261, %v253, 0.0
        %v263 = vsel %vm261, %v254, 0.0
        %v264 = vadd.f32 %v262, %v263
        %v265 = vsel %vm261, %v255, 0.0
        %v266 = vadd.f32 %v264, %v265
        %v267 = vsel %vm261, %v256, 0.0
        %v268 = vadd.f32 %v266, %v267
        %v269 = vsel %vm261, %v257, 0.0
        %v270 = vadd.f32 %v268, %v269
        %v271 = vsel %vm261, %v258, 0.0
        %v272 = vadd.f32 %v270, %v271
        %v273 = vsel %vm261, %v259, 0.0
        %v274 = vadd.f32 %v272, %v273
        %v275 = vsel %vm261, %v260, 0.0
        %v276 = vadd.f32 %v274, %v275
        %v277 = vrot.slane %v276, 4
        %v278 = vadd.f32 %v276, %v277
        %v279 = vrot.slane %v278, 2
        %v280 = vadd.f32 %v278, %v279
        %v281 = vrot.slane %v280, 1
        %v282 = vadd.f32 %v280, %v281
        %v283 = vmax.f32 %v282, 0.0
        %v284 = vmul.f32 %v245, %v283
        %v285 = vmul.f32 %v246, %v283
        %v286 = vmul.f32 %v247, %v283
        %v287 = vmul.f32 %v248, %v283
        %v288 = vmul.f32 %v249, %v283
        %v289 = vmul.f32 %v250, %v283
        %v290 = vmul.f32 %v251, %v283
        %v291 = vmul.f32 %v252, %v283
        %v292 = vsel %vm261, %v284, 0.0
        %293 = vadd.xlane.f32.xlu0 %v292
        %v294 = vpop.xlane.xlu0 %293
        %v295 = vsel %vm261, %v285, 0.0
        %296 = vadd.xlane.f32.xlu0 %v295
        %v297 = vpop.xlane.xlu0 %296
        %v298 = vsel %vm261, %v286, 0.0
        %299 = vadd.xlane.f32.xlu0 %v298
        %v300 = vpop.xlane.xlu0 %299
        %v301 = vsel %vm261, %v287, 0.0
        %302 = vadd.xlane.f32.xlu0 %v301
        %v303 = vpop.xlane.xlu0 %302
        %v304 = vsel %vm261, %v288, 0.0
        %305 = vadd.xlane.f32.xlu0 %v304
        %v306 = vpop.xlane.xlu0 %305
        %v307 = vsel %vm261, %v289, 0.0
        %308 = vadd.xlane.f32.xlu0 %v307
        %v309 = vpop.xlane.xlu0 %308
        %v310 = vsel %vm261, %v290, 0.0
        %311 = vadd.xlane.f32.xlu0 %v310
        %v312 = vpop.xlane.xlu0 %311
        %v313 = vsel %vm261, %v291, 0.0
        %314 = vadd.xlane.f32.xlu0 %v313
        %v315 = vpop.xlane.xlu0 %314
        %v316 = vsub.f32 0.0, %v294
        %v317 = vsub.f32 0.0, %v297
        %v318 = vsub.f32 0.0, %v300
        %v319 = vsub.f32 0.0, %v303
        %v320 = vsub.f32 0.0, %v306
        %v321 = vsub.f32 0.0, %v309
        %v322 = vsub.f32 0.0, %v312
        %v323 = vsub.f32 0.0, %v315
        %v324 = vmul.f32 %v316, 1.442695
        %v325 = vpow.pop %v324
        %v326 = vmul.f32 %v317, 1.442695
        %v327 = vpow.pop %v326
        %v328 = vmul.f32 %v318, 1.442695
        %v329 = vpow.pop %v328
        %v330 = vmul.f32 %v319, 1.442695
        %v331 = vpow.pop %v330
        %v332 = vmul.f32 %v320, 1.442695
        %v333 = vpow.pop %v332
        %v334 = vmul.f32 %v321, 1.442695
        %v335 = vpow.pop %v334
        %v336 = vmul.f32 %v322, 1.442695
        %v337 = vpow.pop %v336
        %v338 = vmul.f32 %v323, 1.442695
        %v339 = vpow.pop %v338
        %v340 = vadd.f32 %v325, 1.0
        %v341 = vadd.f32 %v327, 1.0
        %v342 = vadd.f32 %v329, 1.0
        %v343 = vadd.f32 %v331, 1.0
        %v344 = vadd.f32 %v333, 1.0
        %v345 = vadd.f32 %v335, 1.0
        %v346 = vadd.f32 %v337, 1.0
        %v347 = vadd.f32 %v339, 1.0
        %v348 = vrcp.pop %v340
        %v349 = vmul.f32 1.0, %v348
        %v350 = vrcp.pop %v341
        %v351 = vmul.f32 1.0, %v350
        %v352 = vrcp.pop %v342
        %v353 = vmul.f32 1.0, %v352
        %v354 = vrcp.pop %v343
        %v355 = vmul.f32 1.0, %v354
        %v356 = vrcp.pop %v344
        %v357 = vmul.f32 1.0, %v356
        %v358 = vrcp.pop %v345
        %v359 = vmul.f32 1.0, %v358
        %v360 = vrcp.pop %v346
        %v361 = vmul.f32 1.0, %v360
        %v362 = vrcp.pop %v347
        %v363 = vmul.f32 1.0, %v362
        %v364 = vmul.f32 %v189, %v349
        %v365 = vmul.f32 %v190, %v349
        %v366 = vmul.f32 %v191, %v351
        %v367 = vmul.f32 %v192, %v351
        %v368 = vmul.f32 %v193, %v353
        %v369 = vmul.f32 %v194, %v353
        %v370 = vmul.f32 %v195, %v355
        %v371 = vmul.f32 %v196, %v355
        %v372 = vmul.f32 %v197, %v357
        %v373 = vmul.f32 %v198, %v357
        %v374 = vmul.f32 %v199, %v359
        %v375 = vmul.f32 %v200, %v359
        %v376 = vmul.f32 %v201, %v361
        %v377 = vmul.f32 %v202, %v361
        %v378 = vmul.f32 %v203, %v363
        %v379 = vmul.f32 %v204, %v363
        %380 = vst [vmem:[%s188] sm:$0xff] %v364
        %381 = vst [vmem:[%s188 + $0x8] sm:$0xff] %v365
        %382 = vst [vmem:[%s188 + $0x10] sm:$0xff] %v366
        %383 = vst [vmem:[%s188 + $0x18] sm:$0xff] %v367
        %384 = vst [vmem:[%s188 + $0x20] sm:$0xff] %v368
        %385 = vst [vmem:[%s188 + $0x28] sm:$0xff] %v369
        %386 = vst [vmem:[%s188 + $0x30] sm:$0xff] %v370
        %387 = vst [vmem:[%s188 + $0x38] sm:$0xff] %v371
        %388 = vst [vmem:[%s188 + $0x40] sm:$0xff] %v372
        %389 = vst [vmem:[%s188 + $0x48] sm:$0xff] %v373
        %390 = vst [vmem:[%s188 + $0x50] sm:$0xff] %v374
        %391 = vst [vmem:[%s188 + $0x58] sm:$0xff] %v375
        %392 = vst [vmem:[%s188 + $0x60] sm:$0xff] %v376
        %393 = vst [vmem:[%s188 + $0x68] sm:$0xff] %v377
        %394 = vst [vmem:[%s188 + $0x70] sm:$0xff] %v378
        %395 = vst [vmem:[%s188 + $0x78] sm:$0xff] %v379
        %s396 = sand.u32 %s96, 1
        %s397 = scalar_lea.sflag [#allocation4], %s396
        %s398 = sand.u32 %s96, 1
        %s399 = smul.addr %s398, 128
        %s400 = scalar_lea.vmem [#allocation5], %s399
        // Predicated region
        $region37: #{tpu_custom_call.1} parent=31 // pred_check
          %p401 = pneg %p106
        $region38: #{tpu_custom_call.1} parent=31 // pred_check_branch
          %403 = sbr.rel (%p401) target = $region40
        $region39: #{tpu_custom_call.1} parent=31 // pred_region
          %s405 = ssub.s32 2048, 2048
          %406 = vsyncadd %s397, %s405
          %s407 = smul.addr %s20, 16
          %s408 = smul.addr %s407, 128
          %s409 = scalar_lea.hbm %s3, %s408
          %s410 = sshll.u32 %s400, 4
          %s411 = int_to_ptr.vmem [resolvable:$true] %s410
          %416 = dma.vmem_to_hbm [thread:$0]  %s411, 2048, %s409, %s397, 256, 256, 16
        $region40: #{tpu_custom_call.1} parent=31 // pred_fallthru
          _
      $region32: #{tpu_custom_call.1} parent=5 // pred_fallthru
        _
      %p417 = scmp.le.s32.totalorder 2, %s15
      // Predicated region
      $region41: #{tpu_custom_call.1} parent=5 // pred_check
        %p418 = pneg %p417
      $region42: #{tpu_custom_call.1} parent=5 // pred_check_branch
        %420 = sbr.rel (%p418) target = $region44
      $region43: #{tpu_custom_call.1} parent=5 // pred_region
        %s421 = ssub.s32 %s15, 2
        // Predicated region
        $region45: #{tpu_custom_call.1} parent=43 // pred_check
          %p422 = pneg %p112
        $region46: #{tpu_custom_call.1} parent=43 // pred_check_branch
          %424 = sbr.rel (%p422) target = $region48
        $region47: #{tpu_custom_call.1} parent=43 // pred_region
          %s425 = sand.u32 %s97, 1
          %s426 = scalar_lea.sflag [#allocation4], %s425
          %s427 = sand.u32 %s97, 1
          %s428 = smul.addr %s427, 128
          %s429 = scalar_lea.vmem [#allocation5], %s428
          %430 = dma.done %s426, 2048
        $region48: #{tpu_custom_call.1} parent=43 // pred_fallthru
          _
      $region44: #{tpu_custom_call.1} parent=5 // pred_fallthru
        _
    $region6: #{tpu_custom_call.1} parent=1 // loop_footer
      %s19 = sadd.s32 1, %s15
    $region7: #{tpu_custom_call.1} parent=1 // loop_footer_branch
      %14 = sbr.rel target = $region3
    $region8: #{tpu_custom_call.1} parent=1 // loop_exit
      _
    %431 = vsyncpa [#allocation3], 1
    %s432 = scalar_lea.sflag [#allocation3], 1
    %433 = vsyncpa %s432, 1
    %434 = vsyncpa [#allocation4], 1
    %s435 = scalar_lea.sflag [#allocation4], 1
    %436 = vsyncpa %s435, 1

</llo_original>
